<compile_context>
chip_gen: v5e
topology: v5e:2x2
jax: 0.10.0
libtpu: 0.0.40
codegen_flags: <defaults>
</compile_context>

<pallas_src>
import functools

import numpy as np
import jax
import jax.numpy as jnp
from jax.experimental import pallas as pl
from jax.experimental.pallas import tpu as pltpu


# ----------------------------------------------------------------------------
# Kernel
# ----------------------------------------------------------------------------
def _g2_kernel(x_ref, w_ref, b_ref, c1_ref, c2_ref, c3_ref, o_ref, *, eg, he):
    """One token tile.

    x_ref : (TN, E)            bf16  activations
    w_ref : (E, 2*eg + 2*he)   bf16  fused + pre-expanded projection weights
    b_ref : (1, 2*eg + 2*he)   f32   fused + pre-expanded bias
    c1_ref: (eg, he)           f32   segmented reduce over d   -> qg (tiled per j)
    c2_ref: (he, he)           f32   segmented reduce over d'  -> att (tiled per d)
    c3_ref: (he, E)            f32   segmented reduce over j   -> out
    o_ref : (TN, E)            f32   output
    """
    # Single wide MXU projection (bf16 inputs, f32 accumulation + f32 bias).
    proj = jnp.dot(x_ref[...], w_ref[...],
                   preferred_element_type=jnp.float32) + b_ref[...]

    # 128-aligned lane-dense slabs (static, cheap slices).
    g_e = proj[:, :eg]                  # g   laid out (h, d, d')
    q_e = proj[:, eg:2 * eg]            # q   each feature replicated Dh times
    k_e = proj[:, 2 * eg:2 * eg + he]   # k   tiled H times
    v_e = proj[:, 2 * eg + he:]         # v   tiled H times

    # qg[h, d'] = sum_d q[h, d] * g[h, d, d']   (q_e / g_e die here)
    qg_e = jnp.dot(q_e * g_e, c1_ref[...], preferred_element_type=jnp.float32)
    # att[h, j] = sum_d' qg[h, d'] * k[j, d']
    att_e = jnp.dot(qg_e * k_e, c2_ref[...], preferred_element_type=jnp.float32)
    # out[h, d] = sum_j att[h, j] * v[j, d]
    out = jnp.dot(att_e * v_e, c3_ref[...], preferred_element_type=jnp.float32)

    # One lane-dense store of the full tile.
    o_ref[...] = out.astype(o_ref.dtype)


# ----------------------------------------------------------------------------
# Constant 0/1 index-map matrices
# ----------------------------------------------------------------------------
def _expansion_maps(num_heads, head_dim):
    """Folded into the weights on the host: q-repeat and k/v-tile expansions."""
    h, dh = num_heads, head_dim
    e, eg, he = h * dh, h * dh * dh, h * h * dh
    c = np.arange(eg)      # c = h*dh*dh + d*dh + d'
    u = np.arange(he)      # u = h*e + j*dh + dd
    f = np.arange(e)       # f = h*dh + d
    rep_q = (c[None, :] // dh == f[:, None]).astype(np.float32)   # qE[c] = q[c//dh]
    tile = (u[None, :] % e == f[:, None]).astype(np.float32)      # kE[u] = k[u%e]
    return rep_q, tile


def _reduce_maps(num_heads, head_dim):
    """Segmented-reduction matrices used inside the kernel (reductions on MXU)."""
    h, dh = num_heads, head_dim
    e, eg, he = h * dh, h * dh * dh, h * h * dh
    c = np.arange(eg)
    u = np.arange(he)
    f = np.arange(e)
    c_h, c_dp = c // (dh * dh), c % dh
    u_h, u_j, u_d = u // e, (u % e) // dh, u % dh
    f_h, f_d = f // dh, f % dh
    # C1: sum over d  (keep h, d'):  qgE = (qE * g) @ C1
    c1 = (c_h[:, None] == u_h[None, :]) & (c_dp[:, None] == u_d[None, :])
    # C2: sum over d' (keep h, j):   attE = (qgE * kE) @ C2
    c2 = (u_h[:, None] == u_h[None, :]) & (u_j[:, None] == u_j[None, :])
    # C3: sum over j  (keep h, d):   out  = (attE * vE) @ C3
    c3 = (u_h[:, None] == f_h[None, :]) & (u_d[:, None] == f_d[None, :])
    return (c1.astype(np.float32), c2.astype(np.float32), c3.astype(np.float32))


def _choose_token_tile(n):
    # Large tiles amortize the ~0.35us/grid-step overhead; keep >= 2 tiles so the
    # "parallel" token axis can shard across both TensorCores on v7x.
    for tn in (512, 256, 128, 64, 32, 16, 8):
        if n % tn == 0 and n // tn >= 2:
            return tn
    return n


# ----------------------------------------------------------------------------
# Wrapper
# ----------------------------------------------------------------------------
def qkv_attention_g2(x, params, num_heads):
    """x: (B, S, E) f32. params: wq/wk/wv (E,E), wg (E,E*Dh), bq/bk/bv (E,), bg (E*Dh,)."""
    b, s, e = x.shape
    assert e % num_heads == 0
    dh = e // num_heads
    eg = e * dh              # width of g / expanded-q slab
    he = num_heads * e       # width of tiled k / v slab
    wtot = 2 * eg + 2 * he
    n = b * s

    # --- host-side (one-time, weights only) weight/bias folding --------------
    rep_q, tile = _expansion_maps(num_heads, dh)
    w_big = jnp.concatenate(
        [params["wg"],
         params["wq"] @ rep_q,
         params["wk"] @ tile,
         params["wv"] @ tile], axis=1)                       # (E, wtot)
    b_big = jnp.concatenate(
        [params["bg"],
         params["bq"] @ rep_q,
         params["bk"] @ tile,
         params["bv"] @ tile], axis=0).reshape(1, wtot)      # (1, wtot) f32

    c1, c2, c3 = (jnp.asarray(m) for m in _reduce_maps(num_heads, dh))

    # bf16 activations/weights on the MXU; f32 accumulation + f32 attention math.
    x2d = x.reshape(n, e).astype(jnp.bfloat16)
    w_big = w_big.astype(jnp.bfloat16)

    tn = _choose_token_tile(n)
    full = lambda shape: pl.BlockSpec(shape, lambda i: (0, 0))
    kernel = functools.partial(_g2_kernel, eg=eg, he=he)

    out2d = pl.pallas_call(
        kernel,
        out_shape=jax.ShapeDtypeStruct((n, e), x.dtype),
        grid_spec=pltpu.PrefetchScalarGridSpec(
            num_scalar_prefetch=0,
            grid=(n // tn,),
            in_specs=[
                pl.BlockSpec((tn, e), lambda i: (i, 0)),  # x (pipelined over tokens)
                full((e, wtot)),      # fused / pre-expanded weights (grid-invariant)
                full((1, wtot)),      # fused bias
                full((eg, he)),       # C1
                full((he, he)),       # C2
                full((he, e)),        # C3
            ],
            out_specs=pl.BlockSpec((tn, e), lambda i: (i, 0)),
        ),
        compiler_params=pltpu.CompilerParams(
            dimension_semantics=("parallel",),
            vmem_limit_bytes=32 * 1024 * 1024),
    )(x2d, w_big, b_big, c1, c2, c3)

    return out2d.reshape(b, s, e)


# ----------------------------------------------------------------------------
# Pure-JAX reference matching the PyTorch forward exactly (f32, unfused)
# ----------------------------------------------------------------------------
def _reference(x, params, num_heads):
    b, s, e = x.shape
    h = num_heads
    dh = e // h
    q = x @ params["wq"] + params["bq"]
    k = x @ params["wk"] + params["bk"]
    v = x @ params["wv"] + params["bv"]
    g = x @ params["wg"] + params["bg"]
    q = q.reshape(b, s, h, dh)
    k = k.reshape(b, s, h, dh)
    v = v.reshape(b, s, h, dh)
    g = g.reshape(b, s, h, dh, dh)
    qg = jnp.einsum("bshd,bshde->bshe", q, g)     # (_q @ g).squeeze(-2)
    att = jnp.einsum("bshe,bsje->bshj", qg, k)    # _att @ k^T  (across heads)
    out = jnp.einsum("bshj,bsjd->bshd", att, v)   # _att @ v
    return out.reshape(b, s, e)


def _init_params(key, embed_dim, num_heads):
    """Deterministic synthetic init ~ PyTorch Linear's U(-1/sqrt(E), 1/sqrt(E))."""
    dh = embed_dim // num_heads
    keys = jax.random.split(key, 8)
    bound = 1.0 / (embed_dim ** 0.5)
    u = lambda k, shape: jax.random.uniform(k, shape, jnp.float32, -bound, bound)
    return {
        "wq": u(keys[0], (embed_dim, embed_dim)),
        "wk": u(keys[1], (embed_dim, embed_dim)),
        "wv": u(keys[2], (embed_dim, embed_dim)),
        "wg": u(keys[3], (embed_dim, embed_dim * dh)),
        "bq": u(keys[4], (embed_dim,)),
        "bk": u(keys[5], (embed_dim,)),
        "bv": u(keys[6], (embed_dim,)),
        "bg": u(keys[7], (embed_dim * dh,)),
    }


if __name__ == "__main__":
    B, S, E, H = 2, 8, 32, 4          # batch, seq, embed_dim, num_heads (Dh = 8)
    key = jax.random.PRNGKey(0)
    kx, kp = jax.random.split(key)
    x = jax.random.normal(kx, (B, S, E), dtype=jnp.float32)
    params = _init_params(kp, E, H)

    out = qkv_attention_g2(x, params, num_heads=H)
    out = jax.block_until_ready(out)

    ref = _reference(x, params, num_heads=H)
    assert out.shape == (B, S, E)
    # bf16 projections -> scale-aware tolerance (f32 accumulation keeps this small).
    err = float(jnp.max(jnp.abs(out - ref)) / (jnp.max(jnp.abs(ref)) + 1e-6))
    assert err < 5e-2, f"mismatch vs reference: rel_err={err:.4f}"

    print("KERNEL_OK")
</pallas_src>

<mosaic_0001>
module attributes {stable_mosaic.version = 11 : i64} {
  func.func @_g2_kernel(%arg0: i32, %arg1: memref<8x32xbf16, #tpu.memory_space<vmem>>, %arg2: memref<32x768xbf16, #tpu.memory_space<vmem>>, %arg3: memref<1x768xf32, #tpu.memory_space<vmem>>, %arg4: memref<256x128xf32, #tpu.memory_space<vmem>>, %arg5: memref<128x128xf32, #tpu.memory_space<vmem>>, %arg6: memref<128x32xf32, #tpu.memory_space<vmem>>, %arg7: memref<8x32xf32, #tpu.memory_space<vmem>>) attributes {dimension_semantics = [#tpu.dimension_semantics<parallel>], iteration_bounds = array<i64: 2>, scalar_prefetch = 0 : i64, scratch_operands = 0 : i64, tpu.core_type = #tpu.core_type<tc>, window_params = [{transform_indices = @transform_0, window_bounds = array<i64: 8, 32>}, {pipeline_mode = #tpu.pipeline_mode<synchronous>, transform_indices = @transform_1, window_bounds = array<i64: 32, 768>}, {pipeline_mode = #tpu.pipeline_mode<synchronous>, transform_indices = @transform_2, window_bounds = array<i64: 1, 768>}, {pipeline_mode = #tpu.pipeline_mode<synchronous>, transform_indices = @transform_3, window_bounds = array<i64: 256, 128>}, {pipeline_mode = #tpu.pipeline_mode<synchronous>, transform_indices = @transform_4, window_bounds = array<i64: 128, 128>}, {pipeline_mode = #tpu.pipeline_mode<synchronous>, transform_indices = @transform_5, window_bounds = array<i64: 128, 32>}, {transform_indices = @transform_6, window_bounds = array<i64: 8, 32>}]} {
    %c0 = arith.constant 0 : index
    %c0_0 = arith.constant 0 : index
    %0 = vector.load %arg1[%c0, %c0_0] : memref<8x32xbf16, #tpu.memory_space<vmem>>, vector<8x32xbf16>
    %c0_1 = arith.constant 0 : index
    %c0_2 = arith.constant 0 : index
    %1 = vector.load %arg2[%c0_1, %c0_2] : memref<32x768xbf16, #tpu.memory_space<vmem>>, vector<32x768xbf16>
    %cst = arith.constant dense<0.000000e+00> : vector<8x768xf32>
    %2 = tpu.matmul %0, %1, %cst {dimension_numbers = #tpu.dot_dimension_numbers<[1], [0], [0], [1], [0, 0, 1, 1], [], []>} : vector<8x32xbf16>, vector<32x768xbf16>, vector<8x768xf32> -> vector<8x768xf32>
    %c0_3 = arith.constant 0 : index
    %c0_4 = arith.constant 0 : index
    %3 = vector.load %arg3[%c0_3, %c0_4] : memref<1x768xf32, #tpu.memory_space<vmem>>, vector<1x768xf32>
    %4 = vector.broadcast %3 : vector<1x768xf32> to vector<8x768xf32>
    %5 = arith.addf %2, %4 : vector<8x768xf32>
    %6 = vector.extract_strided_slice %5 {offsets = [0, 0], sizes = [8, 256], strides = [1, 1]} : vector<8x768xf32> to vector<8x256xf32>
    %7 = vector.extract_strided_slice %5 {offsets = [0, 256], sizes = [8, 256], strides = [1, 1]} : vector<8x768xf32> to vector<8x256xf32>
    %8 = vector.extract_strided_slice %5 {offsets = [0, 512], sizes = [8, 128], strides = [1, 1]} : vector<8x768xf32> to vector<8x128xf32>
    %9 = vector.extract_strided_slice %5 {offsets = [0, 640], sizes = [8, 128], strides = [1, 1]} : vector<8x768xf32> to vector<8x128xf32>
    %10 = arith.mulf %7, %6 : vector<8x256xf32>
    %c0_5 = arith.constant 0 : index
    %c0_6 = arith.constant 0 : index
    %11 = vector.load %arg4[%c0_5, %c0_6] : memref<256x128xf32, #tpu.memory_space<vmem>>, vector<256x128xf32>
    %cst_7 = arith.constant dense<0.000000e+00> : vector<8x128xf32>
    %12 = tpu.matmul %10, %11, %cst_7 {dimension_numbers = #tpu.dot_dimension_numbers<[1], [0], [0], [1], [0, 0, 1, 1], [], []>} : vector<8x256xf32>, vector<256x128xf32>, vector<8x128xf32> -> vector<8x128xf32>
    %13 = arith.mulf %12, %8 : vector<8x128xf32>
    %c0_8 = arith.constant 0 : index
    %c0_9 = arith.constant 0 : index
    %14 = vector.load %arg5[%c0_8, %c0_9] : memref<128x128xf32, #tpu.memory_space<vmem>>, vector<128x128xf32>
    %cst_10 = arith.constant dense<0.000000e+00> : vector<8x128xf32>
    %15 = tpu.matmul %13, %14, %cst_10 {dimension_numbers = #tpu.dot_dimension_numbers<[1], [0], [0], [1], [0, 0, 1, 1], [], []>} : vector<8x128xf32>, vector<128x128xf32>, vector<8x128xf32> -> vector<8x128xf32>
    %16 = arith.mulf %15, %9 : vector<8x128xf32>
    %c0_11 = arith.constant 0 : index
    %c0_12 = arith.constant 0 : index
    %17 = vector.load %arg6[%c0_11, %c0_12] : memref<128x32xf32, #tpu.memory_space<vmem>>, vector<128x32xf32>
    %cst_13 = arith.constant dense<0.000000e+00> : vector<8x32xf32>
    %18 = tpu.matmul %16, %17, %cst_13 {dimension_numbers = #tpu.dot_dimension_numbers<[1], [0], [0], [1], [0, 0, 1, 1], [], []>} : vector<8x128xf32>, vector<128x32xf32>, vector<8x32xf32> -> vector<8x32xf32>
    %c0_14 = arith.constant 0 : index
    %c0_15 = arith.constant 0 : index
    %19 = vector.load %arg7[%c0_14, %c0_15] : memref<8x32xf32, #tpu.memory_space<vmem>>, vector<8x32xf32>
    tpu.vector_store %arg7[%c0_14, %c0_15], %18 {strides = array<i32>} : memref<8x32xf32, #tpu.memory_space<vmem>>, vector<8x32xf32>,
    return
  }
  func.func @transform_0(%arg0: i32) -> (i32, i32) {
    %c0_i32 = arith.constant 0 : i32
    %c0_i32_0 = arith.constant 0 : i32
    return %arg0, %c0_i32 : i32, i32
  }
  func.func @transform_1(%arg0: i32) -> (i32, i32) {
    %c0_i32 = arith.constant 0 : i32
    %c0_i32_0 = arith.constant 0 : i32
    %c0_i32_1 = arith.constant 0 : i32
    return %c0_i32, %c0_i32_0 : i32, i32
  }
  func.func @transform_2(%arg0: i32) -> (i32, i32) {
    %c0_i32 = arith.constant 0 : i32
    %c0_i32_0 = arith.constant 0 : i32
    %c0_i32_1 = arith.constant 0 : i32
    return %c0_i32, %c0_i32_0 : i32, i32
  }
  func.func @transform_3(%arg0: i32) -> (i32, i32) {
    %c0_i32 = arith.constant 0 : i32
    %c0_i32_0 = arith.constant 0 : i32
    %c0_i32_1 = arith.constant 0 : i32
    return %c0_i32, %c0_i32_0 : i32, i32
  }
  func.func @transform_4(%arg0: i32) -> (i32, i32) {
    %c0_i32 = arith.constant 0 : i32
    %c0_i32_0 = arith.constant 0 : i32
    %c0_i32_1 = arith.constant 0 : i32
    return %c0_i32, %c0_i32_0 : i32, i32
  }
  func.func @transform_5(%arg0: i32) -> (i32, i32) {
    %c0_i32 = arith.constant 0 : i32
    %c0_i32_0 = arith.constant 0 : i32
    %c0_i32_1 = arith.constant 0 : i32
    return %c0_i32, %c0_i32_0 : i32, i32
  }
  func.func @transform_6(%arg0: i32) -> (i32, i32) {
    %c0_i32 = arith.constant 0 : i32
    %c0_i32_0 = arith.constant 0 : i32
    return %arg0, %c0_i32 : i32, i32
  }
}

</mosaic_0001>

<llo_original>
// kernel: tpu_custom_call.1
$region0: #{tpu_custom_call.1}
  #allocation0 [shape = 'u32[]', space=smem, size = 0x4, offset = 0x4, fixed_abs, tag = 'smem constant byte address 0x4 - core index']
  #allocation1 [shape = 'u32[72,128]{1,0:T(1,128)}', space=vmem, size = 0x9000, scoped, tag = 'internal scratch']
  %s0 = inlined_call_operand.vmem [shape: bf16[16,32], index: 0, kind: input, shape index: {}]
  %s1 = inlined_call_operand.hbm [shape: bf16[32,768], index: 1, kind: input, shape index: {}]
  %s2 = inlined_call_operand.vmem [shape: f32[1,768], index: 2, kind: input, shape index: {}]
  %s3 = inlined_call_operand.hbm [shape: f32[256,128], index: 3, kind: input, shape index: {}]
  %s4 = inlined_call_operand.vmem [shape: f32[128,128], index: 4, kind: input, shape index: {}]
  %s5 = inlined_call_operand.vmem [shape: f32[128,32], index: 5, kind: input, shape index: {}]
  %s6 = inlined_call_operand.hbm [shape: f32[16,32], index: 6, kind: output, shape index: {}]
  %s7 = sld [smem:[#allocation0]]
  $region65: #{tpu_custom_call.1} parent=0
    _
  %s9 = ssub.s32 1, %s7
  %s10 = scalar_select 0, %s9, %s7
  $region1: #{tpu_custom_call.1} parent=0
    #allocation2 [shape = 'u8[49152]{0}', space=vmem, size = 0xc000, scoped, tag = 'input window, operand 1, single buffered']
    #allocation3 [shape = 's32[2]{0}', space=sflag, size = 0x8, scoped, tag = 'scoped memory for tpu_custom_call.1']
    #allocation4 [shape = 's32[2]{0}', space=sflag, size = 0x8, scoped, tag = 'scoped memory for tpu_custom_call.1']
    #allocation5 [shape = 'u8[131072]{0}', space=vmem, size = 0x20000, scoped, tag = 'input window, operand 3, single buffered']
    #allocation6 [shape = 's32[1]{0}', space=sflag, size = 0x4, scoped, tag = 'scoped memory for tpu_custom_call.1']
    #allocation7 [shape = 'u8[8192]{0}', space=vmem, size = 0x2000, scoped, tag = 'output window, operand 0']
    %11 = vsyncpa [#allocation3], 0
    %12 = vsyncpa [#allocation6], 0
    %13 = vsyncpa [#allocation4], 0
    %s14 = scalar_lea.sflag [#allocation4], 1
    %15 = vsyncpa %s14, 0
    loop: start=0, step=1, limit=4
    $region2: #{tpu_custom_call.1} parent=1 // loop_pre_header
      _
    $region3: #{tpu_custom_call.1} parent=1 // loop_header
      %s17 = sphi 0, %s21
      %p18 = scmp.ge.s32.totalorder %s17, 4
      %s27 = sphi 0, %s29
      %s30 = sphi 0, %s27
      %s31 = sphi 0, %s30
      %s47 = sphi 0, %s31
      %s51 = sphi 0, %s51
      %s53 = sphi 0, %s51
      %s54 = sphi 0, %s53
      %s68 = sphi 0, %s54
      %s72 = sphi 0, %s72
      %s74 = sphi 0, %s72
      %s75 = sphi 0, %s74
      %s89 = sphi 0, %s75
      %s93 = sphi 0, %s93
      %s95 = sphi 0, %s93
      %s96 = sphi 0, %s95
      %s110 = sphi 0, %s96
      %s114 = sphi 0, %s114
      %s116 = sphi 0, %s114
      %s117 = sphi 0, %s116
      %s131 = sphi 0, %s117
      %s135 = sphi 0, %s135
      %s137 = sphi 0, %s135
      %s138 = sphi 0, %s137
      %s152 = sphi 0, %s138
      %s158 = sphi 0, %s160
      %s161 = sphi 0, %s158
      %s162 = sphi 0, %s161
      %s178 = sphi 0, %s162
    $region4: #{tpu_custom_call.1} parent=1 // loop_header_branch
      %20 = sbr.rel (%p18) target = $region8
    $region5: #{tpu_custom_call.1} parent=1 // loop_body
      %s22 = ssub.s32 %s17, 1
      %s23 = ssub.s32 %s17, 2
      %s24 = sadd.s32 %s17, 1
      %s25 = ssub.s32 %s17, %s24
      %p26 = scmp.eq.s32.totalorder %s25, 0
      %s28 = sadd.s32 %s27, 1
      %s29 = scalar_select %p26, %s27, %s28
      %p32 = pneg %p26
      %p33 = scmp.eq.s32.totalorder %s17, 1
      %p34 = por %p32, %p33
      %p35 = scmp.ne.s32.totalorder %s27, %s30
      %p36 = scmp.eq.s32.totalorder %s17, 0
      %p37 = por %p35, %p36
      %p38 = scmp.ne.s32.totalorder %s27, %s30
      %p39 = scmp.eq.s32.totalorder %s22, 1
      %p40 = por %p38, %p39
      %p41 = scmp.ne.s32.totalorder %s30, %s31
      %p42 = scmp.eq.s32.totalorder %s22, 0
      %p43 = por %p41, %p42
      %p44 = scmp.ne.s32.totalorder %s30, %s31
      %p45 = scmp.eq.s32.totalorder %s23, 1
      %p46 = por %p44, %p45
      %p48 = scmp.ne.s32.totalorder %s31, %s47
      %p49 = scmp.eq.s32.totalorder %s23, 0
      %p50 = por %p48, %p49
      %s52 = sadd.s32 %s51, 1
      %p55 = scmp.eq.s32.totalorder %s17, 1
      %p56 = scmp.ne.s32.totalorder %s51, %s53
      %p57 = scmp.eq.s32.totalorder %s17, 0
      %p58 = por %p56, %p57
      %p59 = scmp.ne.s32.totalorder %s51, %s53
      %p60 = scmp.eq.s32.totalorder %s22, 1
      %p61 = por %p59, %p60
      %p62 = scmp.ne.s32.totalorder %s53, %s54
      %p63 = scmp.eq.s32.totalorder %s22, 0
      %p64 = por %p62, %p63
      %p65 = scmp.ne.s32.totalorder %s53, %s54
      %p66 = scmp.eq.s32.totalorder %s23, 1
      %p67 = por %p65, %p66
      %p69 = scmp.ne.s32.totalorder %s54, %s68
      %p70 = scmp.eq.s32.totalorder %s23, 0
      %p71 = por %p69, %p70
      %s73 = sadd.s32 %s72, 1
      %p76 = scmp.eq.s32.totalorder %s17, 1
      %p77 = scmp.ne.s32.totalorder %s72, %s74
      %p78 = scmp.eq.s32.totalorder %s17, 0
      %p79 = por %p77, %p78
      %p80 = scmp.ne.s32.totalorder %s72, %s74
      %p81 = scmp.eq.s32.totalorder %s22, 1
      %p82 = por %p80, %p81
      %p83 = scmp.ne.s32.totalorder %s74, %s75
      %p84 = scmp.eq.s32.totalorder %s22, 0
      %p85 = por %p83, %p84
      %p86 = scmp.ne.s32.totalorder %s74, %s75
      %p87 = scmp.eq.s32.totalorder %s23, 1
      %p88 = por %p86, %p87
      %p90 = scmp.ne.s32.totalorder %s75, %s89
      %p91 = scmp.eq.s32.totalorder %s23, 0
      %p92 = por %p90, %p91
      %s94 = sadd.s32 %s93, 1
      %p97 = scmp.eq.s32.totalorder %s17, 1
      %p98 = scmp.ne.s32.totalorder %s93, %s95
      %p99 = scmp.eq.s32.totalorder %s17, 0
      %p100 = por %p98, %p99
      %p101 = scmp.ne.s32.totalorder %s93, %s95
      %p102 = scmp.eq.s32.totalorder %s22, 1
      %p103 = por %p101, %p102
      %p104 = scmp.ne.s32.totalorder %s95, %s96
      %p105 = scmp.eq.s32.totalorder %s22, 0
      %p106 = por %p104, %p105
      %p107 = scmp.ne.s32.totalorder %s95, %s96
      %p108 = scmp.eq.s32.totalorder %s23, 1
      %p109 = por %p107, %p108
      %p111 = scmp.ne.s32.totalorder %s96, %s110
      %p112 = scmp.eq.s32.totalorder %s23, 0
      %p113 = por %p111, %p112
      %s115 = sadd.s32 %s114, 1
      %p118 = scmp.eq.s32.totalorder %s17, 1
      %p119 = scmp.ne.s32.totalorder %s114, %s116
      %p120 = scmp.eq.s32.totalorder %s17, 0
      %p121 = por %p119, %p120
      %p122 = scmp.ne.s32.totalorder %s114, %s116
      %p123 = scmp.eq.s32.totalorder %s22, 1
      %p124 = por %p122, %p123
      %p125 = scmp.ne.s32.totalorder %s116, %s117
      %p126 = scmp.eq.s32.totalorder %s22, 0
      %p127 = por %p125, %p126
      %p128 = scmp.ne.s32.totalorder %s116, %s117
      %p129 = scmp.eq.s32.totalorder %s23, 1
      %p130 = por %p128, %p129
      %p132 = scmp.ne.s32.totalorder %s117, %s131
      %p133 = scmp.eq.s32.totalorder %s23, 0
      %p134 = por %p132, %p133
      %s136 = sadd.s32 %s135, 1
      %p139 = scmp.eq.s32.totalorder %s17, 1
      %p140 = scmp.ne.s32.totalorder %s135, %s137
      %p141 = scmp.eq.s32.totalorder %s17, 0
      %p142 = por %p140, %p141
      %p143 = scmp.ne.s32.totalorder %s135, %s137
      %p144 = scmp.eq.s32.totalorder %s22, 1
      %p145 = por %p143, %p144
      %p146 = scmp.ne.s32.totalorder %s137, %s138
      %p147 = scmp.eq.s32.totalorder %s22, 0
      %p148 = por %p146, %p147
      %p149 = scmp.ne.s32.totalorder %s137, %s138
      %p150 = scmp.eq.s32.totalorder %s23, 1
      %p151 = por %p149, %p150
      %p153 = scmp.ne.s32.totalorder %s138, %s152
      %p154 = scmp.eq.s32.totalorder %s23, 0
      %p155 = por %p153, %p154
      %s156 = ssub.s32 %s17, %s24
      %p157 = scmp.eq.s32.totalorder %s156, 0
      %s159 = sadd.s32 %s158, 1
      %s160 = scalar_select %p157, %s158, %s159
      %p163 = pneg %p157
      %p164 = scmp.eq.s32.totalorder %s17, 1
      %p165 = por %p163, %p164
      %p166 = scmp.ne.s32.totalorder %s158, %s161
      %p167 = scmp.eq.s32.totalorder %s17, 0
      %p168 = por %p166, %p167
      %p169 = scmp.ne.s32.totalorder %s158, %s161
      %p170 = scmp.eq.s32.totalorder %s22, 1
      %p171 = por %p169, %p170
      %p172 = scmp.ne.s32.totalorder %s161, %s162
      %p173 = scmp.eq.s32.totalorder %s22, 0
      %p174 = por %p172, %p173
      %p175 = scmp.ne.s32.totalorder %s161, %s162
      %p176 = scmp.eq.s32.totalorder %s23, 1
      %p177 = por %p175, %p176
      %p179 = scmp.ne.s32.totalorder %s162, %s178
      %p180 = scmp.eq.s32.totalorder %s23, 0
      %p181 = por %p179, %p180
      %p182 = scmp.le.s32.totalorder 1, %s17
      %p183 = scmp.lt.s32.totalorder %s17, 3
      %p184 = pnand %p182, %p183
      %p185 = pneg %p184
      // Predicated region
      $region9: #{tpu_custom_call.1} parent=5 // pred_check
        _
      $region10: #{tpu_custom_call.1} parent=5 // pred_check_branch
        %187 = sbr.rel (%p184) target = $region12
      $region11: #{tpu_custom_call.1} parent=5 // pred_region
        %s188 = ssub.s32 %s17, 1
        // Predicated region
        $region13: #{tpu_custom_call.1} parent=11 // pred_check
          %p189 = pneg %p64
        $region14: #{tpu_custom_call.1} parent=11 // pred_check_branch
          %191 = sbr.rel (%p189) target = $region16
        $region15: #{tpu_custom_call.1} parent=11 // pred_region
          %193 = vsyncadd [#allocation3], 0
          %s194 = sshll.u32 %s1, 4
          %s195 = int_to_ptr.hbm [resolvable:$true] %s194
          %s196 = sshll.u32 [#allocation2], 4
          %s197 = int_to_ptr.vmem [resolvable:$true] %s196
          %202 = dma.hbm_to_vmem [thread:$0]  %s195, 1536, %s197, [#allocation3], 384, 384, 24
        $region16: #{tpu_custom_call.1} parent=11 // pred_fallthru
          _
        // Predicated region
        $region17: #{tpu_custom_call.1} parent=11 // pred_check
          %p203 = pneg %p85
        $region18: #{tpu_custom_call.1} parent=11 // pred_check_branch
          %205 = sbr.rel (%p203) target = $region20
        $region19: #{tpu_custom_call.1} parent=11 // pred_region
          _
        $region20: #{tpu_custom_call.1} parent=11 // pred_fallthru
          _
        // Predicated region
        $region21: #{tpu_custom_call.1} parent=11 // pred_check
          %p206 = pneg %p106
        $region22: #{tpu_custom_call.1} parent=11 // pred_check_branch
          %208 = sbr.rel (%p206) target = $region24
        $region23: #{tpu_custom_call.1} parent=11 // pred_region
          %210 = vsyncadd [#allocation6], 0
          %s211 = sshll.u32 %s3, 4
          %s212 = int_to_ptr.hbm [resolvable:$true] %s211
          %s213 = sshll.u32 [#allocation5], 4
          %s214 = int_to_ptr.vmem [resolvable:$true] %s213
          %219 = dma.hbm_to_vmem [thread:$0]  %s212, 4096, %s214, [#allocation6], 128, 128, 8
        $region24: #{tpu_custom_call.1} parent=11 // pred_fallthru
          _
        // Predicated region
        $region25: #{tpu_custom_call.1} parent=11 // pred_check
          %p220 = pneg %p127
        $region26: #{tpu_custom_call.1} parent=11 // pred_check_branch
          %222 = sbr.rel (%p220) target = $region28
        $region27: #{tpu_custom_call.1} parent=11 // pred_region
          _
        $region28: #{tpu_custom_call.1} parent=11 // pred_fallthru
          _
        // Predicated region
        $region29: #{tpu_custom_call.1} parent=11 // pred_check
          %p223 = pneg %p148
        $region30: #{tpu_custom_call.1} parent=11 // pred_check_branch
          %225 = sbr.rel (%p223) target = $region32
        $region31: #{tpu_custom_call.1} parent=11 // pred_region
          _
        $region32: #{tpu_custom_call.1} parent=11 // pred_fallthru
          _
      $region12: #{tpu_custom_call.1} parent=5 // pred_fallthru
        _
      %p226 = scmp.lt.s32.totalorder %s17, 2
      // Predicated region
      $region33: #{tpu_custom_call.1} parent=5 // pred_check
        %p227 = pneg %p226
      $region34: #{tpu_custom_call.1} parent=5 // pred_check_branch
        %229 = sbr.rel (%p227) target = $region36
      $region35: #{tpu_custom_call.1} parent=5 // pred_region
        // Predicated region
        $region37: #{tpu_custom_call.1} parent=35 // pred_check
          %p230 = pneg %p37
        $region38: #{tpu_custom_call.1} parent=35 // pred_check_branch
          %232 = sbr.rel (%p230) target = $region40
        $region39: #{tpu_custom_call.1} parent=35 // pred_region
          %p233 = scmp.lt.s32.totalorder %s17, 1
          %s234 = scalar_select %p233, %s17, 1
          %s235 = smul.addr %s234, 4
          %s236 = scalar_lea.vmem %s0, %s235
        $region40: #{tpu_custom_call.1} parent=35 // pred_fallthru
          _
      $region36: #{tpu_custom_call.1} parent=5 // pred_fallthru
        _
      %p237 = scmp.le.s32.totalorder 1, %s17
      %p238 = scmp.lt.s32.totalorder %s17, 3
      %p239 = pnand %p237, %p238
      %p240 = pneg %p239
      // Predicated region
      $region41: #{tpu_custom_call.1} parent=5 // pred_check
        _
      $region42: #{tpu_custom_call.1} parent=5 // pred_check_branch
        %242 = sbr.rel (%p239) target = $region44
      $region43: #{tpu_custom_call.1} parent=5 // pred_region
        %s243 = ssub.s32 %s17, 1
        // Predicated region
        $region45: #{tpu_custom_call.1} parent=43 // pred_check
          %p244 = pneg %p64
        $region46: #{tpu_custom_call.1} parent=43 // pred_check_branch
          %246 = sbr.rel (%p244) target = $region48
        $region47: #{tpu_custom_call.1} parent=43 // pred_region
          %248 = dma.done [#allocation3], 1536
        $region48: #{tpu_custom_call.1} parent=43 // pred_fallthru
          _
        // Predicated region
        $region49: #{tpu_custom_call.1} parent=43 // pred_check
          %p249 = pneg %p106
        $region50: #{tpu_custom_call.1} parent=43 // pred_check_branch
          %251 = sbr.rel (%p249) target = $region52
        $region51: #{tpu_custom_call.1} parent=43 // pred_region
          %253 = dma.done [#allocation6], 4096
        $region52: #{tpu_custom_call.1} parent=43 // pred_fallthru
          _
        %p254 = scmp.lt.s32.totalorder %s22, 1
        %s255 = scalar_select %p254, %s22, 1
        %s256 = smul.addr %s255, 4
        %s257 = scalar_lea.vmem %s0, %s256
        %p258 = pneg %p43
        %p259 = pneg %p40
        %p260 = pneg %p64
        %p261 = pneg %p61
        %p262 = pneg %p85
        %p263 = pneg %p82
        %p264 = pneg %p106
        %p265 = pneg %p103
        %p266 = pneg %p127
        %p267 = pneg %p124
        %p268 = pneg %p148
        %p269 = pneg %p145
        %p270 = pneg %p174
        %p271 = pneg %p171
        %s272 = sand.u32 %s161, 1
        %s273 = scalar_lea.sflag [#allocation4], %s272
        %s274 = sand.u32 %s161, 1
        %s275 = smul.addr %s274, 8
        %s276 = scalar_lea.vmem [#allocation7], %s275
        %p277 = scmp.lt.s32.totalorder %s22, 1
        %s278 = scalar_select %p277, %s22, 1
        %s279 = smul.addr %s278, 4
        %s280 = scalar_lea.vmem %s0, %s279
        %v282 = vld [vmem:[%s280] sm:$0xf]
        %v283 = vld [vmem:[#allocation2] sm:$0xff]
        %v284 = vld [vmem:[#allocation2 + $0x8] sm:$0xff]
        %v285 = vld [vmem:[#allocation2 + $0x10] sm:$0xff]
        %v286 = vld [vmem:[#allocation2 + $0x18] sm:$0xff]
        %v287 = vld [vmem:[#allocation2 + $0x20] sm:$0xff]
        %v288 = vld [vmem:[#allocation2 + $0x28] sm:$0xff]
        %v289 = vld [vmem:[#allocation2 + $0x30] sm:$0xff]
        %v290 = vld [vmem:[#allocation2 + $0x38] sm:$0xff]
        %v291 = vld [vmem:[#allocation2 + $0x40] sm:$0xff]
        %v292 = vld [vmem:[#allocation2 + $0x48] sm:$0xff]
        %v293 = vld [vmem:[#allocation2 + $0x50] sm:$0xff]
        %v294 = vld [vmem:[#allocation2 + $0x58] sm:$0xff]
        %v295 = vld [vmem:[%s2] sm:$0x3f]
        %v297 = vperm.slane %v295, 0
        %v298 = vperm.slane %v295, 1
        %v299 = vperm.slane %v295, 2
        %v300 = vperm.slane %v295, 3
        %v301 = vperm.slane %v295, 4
        %v302 = vperm.slane %v295, 5
        %v321 = vunpack.c.l.b16 %v283
        %v322 = vunpack.c.h.b16 %v283
        %v323 = vunpack.c.l.b16 %v284
        %v324 = vunpack.c.h.b16 %v284
        %v325 = vunpack.c.l.b16 %v285
        %v326 = vunpack.c.h.b16 %v285
        %v327 = vunpack.c.l.b16 %v286
        %v328 = vunpack.c.h.b16 %v286
        %v329 = vunpack.c.l.b16 %v287
        %v330 = vunpack.c.h.b16 %v287
        %v331 = vunpack.c.l.b16 %v288
        %v332 = vunpack.c.h.b16 %v288
        %v333 = vunpack.c.l.b16 %v289
        %v334 = vunpack.c.h.b16 %v289
        %v335 = vunpack.c.l.b16 %v290
        %v336 = vunpack.c.h.b16 %v290
        %v337 = vunpack.c.l.b16 %v291
        %v338 = vunpack.c.h.b16 %v291
        %v339 = vunpack.c.l.b16 %v292
        %v340 = vunpack.c.h.b16 %v292
        %v341 = vunpack.c.l.b16 %v293
        %v342 = vunpack.c.h.b16 %v293
        %v343 = vunpack.c.l.b16 %v294
        %v344 = vunpack.c.h.b16 %v294
        %v345 = vpack.c.b16 %v327, %v321
        %v346 = vpack.c.b16 %v328, %v322
        %v347 = vpack.c.b16 %v329, %v323
        %v348 = vpack.c.b16 %v330, %v324
        %v349 = vpack.c.b16 %v331, %v325
        %v350 = vpack.c.b16 %v332, %v326
        %v351 = vpack.c.b16 %v339, %v333
        %v352 = vpack.c.b16 %v340, %v334
        %v353 = vpack.c.b16 %v341, %v335
        %v354 = vpack.c.b16 %v342, %v336
        %v355 = vpack.c.b16 %v343, %v337
        %v356 = vpack.c.b16 %v344, %v338
        %vm369 = vcmask 261120
        %v371 = vsel %vm369, %v282, 0
        %373 = vmatpush.bf16.msra.mxu0 0
        %374 = vmatpush.bf16.msra.mxu0 0
        %375 = vmatpush.bf16.msra.mxu0 0
        %376 = vmatpush.bf16.msra.mxu0 0
        %377 = vmatpush.bf16.msra.mxu0 0
        %378 = vmatpush.bf16.msra.mxu0 0
        %379 = vmatpush.bf16.msra.mxu0 %v351
        %380 = vmatpush.bf16.msra.mxu0 %v345
        %381 = vmatmul.bf16.gmra.mxu0 %v371
        %v382 = vpop.f32.mrf.mxu0
        %v383 = vadd.f32 %v297, %v382
        %v384 = vpop.f32.mrf.mxu0
        %385 = vdwg.mxu0
        %386 = vmatpush.bf16.msra.mxu0 0
        %387 = vmatpush.bf16.msra.mxu0 0
        %388 = vmatpush.bf16.msra.mxu0 0
        %389 = vmatpush.bf16.msra.mxu0 0
        %390 = vmatpush.bf16.msra.mxu0 0
        %391 = vmatpush.bf16.msra.mxu0 0
        %392 = vmatpush.bf16.msra.mxu0 %v352
        %393 = vmatpush.bf16.msra.mxu0 %v346
        %394 = vmatmul.bf16.gmra.mxu0 %v371
        %v395 = vpop.f32.mrf.mxu0
        %v396 = vadd.f32 %v298, %v395
        %v397 = vpop.f32.mrf.mxu0
        %398 = vdwg.mxu0
        %399 = vmatpush.bf16.msra.mxu0 0
        %400 = vmatpush.bf16.msra.mxu0 0
        %401 = vmatpush.bf16.msra.mxu0 0
        %402 = vmatpush.bf16.msra.mxu0 0
        %403 = vmatpush.bf16.msra.mxu0 0
        %404 = vmatpush.bf16.msra.mxu0 0
        %405 = vmatpush.bf16.msra.mxu0 %v353
        %406 = vmatpush.bf16.msra.mxu0 %v347
        %407 = vmatmul.bf16.gmra.mxu0 %v371
        %v408 = vpop.f32.mrf.mxu0
        %v409 = vadd.f32 %v299, %v408
        %v410 = vpop.f32.mrf.mxu0
        %411 = vdwg.mxu0
        %412 = vmatpush.bf16.msra.mxu0 0
        %413 = vmatpush.bf16.msra.mxu0 0
        %414 = vmatpush.bf16.msra.mxu0 0
        %415 = vmatpush.bf16.msra.mxu0 0
        %416 = vmatpush.bf16.msra.mxu0 0
        %417 = vmatpush.bf16.msra.mxu0 0
        %418 = vmatpush.bf16.msra.mxu0 %v354
        %419 = vmatpush.bf16.msra.mxu0 %v348
        %420 = vmatmul.bf16.gmra.mxu0 %v371
        %v421 = vpop.f32.mrf.mxu0
        %v422 = vadd.f32 %v300, %v421
        %v423 = vpop.f32.mrf.mxu0
        %424 = vdwg.mxu0
        %425 = vmatpush.bf16.msra.mxu0 0
        %426 = vmatpush.bf16.msra.mxu0 0
        %427 = vmatpush.bf16.msra.mxu0 0
        %428 = vmatpush.bf16.msra.mxu0 0
        %429 = vmatpush.bf16.msra.mxu0 0
        %430 = vmatpush.bf16.msra.mxu0 0
        %431 = vmatpush.bf16.msra.mxu0 %v355
        %432 = vmatpush.bf16.msra.mxu0 %v349
        %433 = vmatmul.bf16.gmra.mxu0 %v371
        %v434 = vpop.f32.mrf.mxu0
        %v435 = vadd.f32 %v301, %v434
        %v436 = vpop.f32.mrf.mxu0
        %437 = vdwg.mxu0
        %438 = vmatpush.bf16.msra.mxu0 0
        %439 = vmatpush.bf16.msra.mxu0 0
        %440 = vmatpush.bf16.msra.mxu0 0
        %441 = vmatpush.bf16.msra.mxu0 0
        %442 = vmatpush.bf16.msra.mxu0 0
        %443 = vmatpush.bf16.msra.mxu0 0
        %444 = vmatpush.bf16.msra.mxu0 %v356
        %445 = vmatpush.bf16.msra.mxu0 %v350
        %446 = vmatmul.bf16.gmra.mxu0 %v371
        %v447 = vpop.f32.mrf.mxu0
        %v448 = vadd.f32 %v302, %v447
        %v449 = vpop.f32.mrf.mxu0
        %450 = vdwg.mxu0
        %v451 = vmul.f32 %v409, %v383
        %v452 = vmul.f32 %v422, %v396
        %v453 = vld [vmem:[#allocation5] sm:$0xff]
        %v454 = vld [vmem:[#allocation5 + $0x8] sm:$0xff]
        %v455 = vld [vmem:[#allocation5 + $0x10] sm:$0xff]
        %v456 = vld [vmem:[#allocation5 + $0x18] sm:$0xff]
        %v457 = vld [vmem:[#allocation5 + $0x20] sm:$0xff]
        %v458 = vld [vmem:[#allocation5 + $0x28] sm:$0xff]
        %v459 = vld [vmem:[#allocation5 + $0x30] sm:$0xff]
        %v460 = vld [vmem:[#allocation5 + $0x38] sm:$0xff]
        %v461 = vld [vmem:[#allocation5 + $0x40] sm:$0xff]
        %v462 = vld [vmem:[#allocation5 + $0x48] sm:$0xff]
        %v463 = vld [vmem:[#allocation5 + $0x50] sm:$0xff]
        %v464 = vld [vmem:[#allocation5 + $0x58] sm:$0xff]
        %v465 = vld [vmem:[#allocation5 + $0x60] sm:$0xff]
        %v466 = vld [vmem:[#allocation5 + $0x68] sm:$0xff]
        %v467 = vld [vmem:[#allocation5 + $0x70] sm:$0xff]
        %v468 = vld [vmem:[#allocation5 + $0x78] sm:$0xff]
        %v469 = vld [vmem:[#allocation5 + $0x80] sm:$0xff]
        %v470 = vld [vmem:[#allocation5 + $0x88] sm:$0xff]
        %v471 = vld [vmem:[#allocation5 + $0x90] sm:$0xff]
        %v472 = vld [vmem:[#allocation5 + $0x98] sm:$0xff]
        %v473 = vld [vmem:[#allocation5 + $0xa0] sm:$0xff]
        %v474 = vld [vmem:[#allocation5 + $0xa8] sm:$0xff]
        %v475 = vld [vmem:[#allocation5 + $0xb0] sm:$0xff]
        %v476 = vld [vmem:[#allocation5 + $0xb8] sm:$0xff]
        %v477 = vld [vmem:[#allocation5 + $0xc0] sm:$0xff]
        %v478 = vld [vmem:[#allocation5 + $0xc8] sm:$0xff]
        %v479 = vld [vmem:[#allocation5 + $0xd0] sm:$0xff]
        %v480 = vld [vmem:[#allocation5 + $0xd8] sm:$0xff]
        %v481 = vld [vmem:[#allocation5 + $0xe0] sm:$0xff]
        %v482 = vld [vmem:[#allocation5 + $0xe8] sm:$0xff]
        %v483 = vld [vmem:[#allocation5 + $0xf0] sm:$0xff]
        %v484 = vld [vmem:[#allocation5 + $0xf8] sm:$0xff]
        %485 = vmatpush.msra.mxu0 %v468
        %486 = vmatpush.msra.mxu0 %v467
        %487 = vmatpush.msra.mxu0 %v466
        %488 = vmatpush.msra.mxu0 %v465
        %489 = vmatpush.msra.mxu0 %v464
        %490 = vmatpush.msra.mxu0 %v463
        %491 = vmatpush.msra.mxu0 %v462
        %492 = vmatpush.msra.mxu0 %v461
        %493 = vmatpush.msra.mxu0 %v460
        %494 = vmatpush.msra.mxu0 %v459
        %495 = vmatpush.msra.mxu0 %v458
        %496 = vmatpush.msra.mxu0 %v457
        %497 = vmatpush.msra.mxu0 %v456
        %498 = vmatpush.msra.mxu0 %v455
        %499 = vmatpush.msra.mxu0 %v454
        %500 = vmatpush.msra.mxu0 %v453
        %501 = vmatmul.f32.gmra.mxu0 %v451
        %v502 = vpop.f32.mrf.mxu0
        %v503 = vadd.f32 0.0, %v502
        %504 = vdwg.mxu0
        %505 = vmatpush.msra.mxu0 %v484
        %506 = vmatpush.msra.mxu0 %v483
        %507 = vmatpush.msra.mxu0 %v482
        %508 = vmatpush.msra.mxu0 %v481
        %509 = vmatpush.msra.mxu0 %v480
        %510 = vmatpush.msra.mxu0 %v479
        %511 = vmatpush.msra.mxu0 %v478
        %512 = vmatpush.msra.mxu0 %v477
        %513 = vmatpush.msra.mxu0 %v476
        %514 = vmatpush.msra.mxu0 %v475
        %515 = vmatpush.msra.mxu0 %v474
        %516 = vmatpush.msra.mxu0 %v473
        %517 = vmatpush.msra.mxu0 %v472
        %518 = vmatpush.msra.mxu0 %v471
        %519 = vmatpush.msra.mxu0 %v470
        %520 = vmatpush.msra.mxu0 %v469
        %521 = vmatmul.f32.gmra.mxu0 %v452
        %v522 = vpop.f32.mrf.mxu0
        %v523 = vadd.f32 %v503, %v522
        %524 = vdwg.mxu0
        %v525 = vmul.f32 %v523, %v435
        %v526 = vld [vmem:[%s4] sm:$0xff]
        %v527 = vld [vmem:[%s4 + $0x8] sm:$0xff]
        %v528 = vld [vmem:[%s4 + $0x10] sm:$0xff]
        %v529 = vld [vmem:[%s4 + $0x18] sm:$0xff]
        %v530 = vld [vmem:[%s4 + $0x20] sm:$0xff]
        %v531 = vld [vmem:[%s4 + $0x28] sm:$0xff]
        %v532 = vld [vmem:[%s4 + $0x30] sm:$0xff]
        %v533 = vld [vmem:[%s4 + $0x38] sm:$0xff]
        %v534 = vld [vmem:[%s4 + $0x40] sm:$0xff]
        %v535 = vld [vmem:[%s4 + $0x48] sm:$0xff]
        %v536 = vld [vmem:[%s4 + $0x50] sm:$0xff]
        %v537 = vld [vmem:[%s4 + $0x58] sm:$0xff]
        %v538 = vld [vmem:[%s4 + $0x60] sm:$0xff]
        %v539 = vld [vmem:[%s4 + $0x68] sm:$0xff]
        %v540 = vld [vmem:[%s4 + $0x70] sm:$0xff]
        %v541 = vld [vmem:[%s4 + $0x78] sm:$0xff]
        %542 = vmatpush.msra.mxu0 %v541
        %543 = vmatpush.msra.mxu0 %v540
        %544 = vmatpush.msra.mxu0 %v539
        %545 = vmatpush.msra.mxu0 %v538
        %546 = vmatpush.msra.mxu0 %v537
        %547 = vmatpush.msra.mxu0 %v536
        %548 = vmatpush.msra.mxu0 %v535
        %549 = vmatpush.msra.mxu0 %v534
        %550 = vmatpush.msra.mxu0 %v533
        %551 = vmatpush.msra.mxu0 %v532
        %552 = vmatpush.msra.mxu0 %v531
        %553 = vmatpush.msra.mxu0 %v530
        %554 = vmatpush.msra.mxu0 %v529
        %555 = vmatpush.msra.mxu0 %v528
        %556 = vmatpush.msra.mxu0 %v527
        %557 = vmatpush.msra.mxu0 %v526
        %558 = vmatmul.f32.gmra.mxu0 %v525
        %v559 = vpop.f32.mrf.mxu0
        %v560 = vadd.f32 0.0, %v559
        %561 = vdwg.mxu0
        %v562 = vmul.f32 %v560, %v448
        %v563 = vld [vmem:[%s5] sm:$0xff]
        %v564 = vld [vmem:[%s5 + $0x8] sm:$0xff]
        %v565 = vld [vmem:[%s5 + $0x10] sm:$0xff]
        %v566 = vld [vmem:[%s5 + $0x18] sm:$0xff]
        %v567 = vld [vmem:[%s5 + $0x20] sm:$0xff]
        %v568 = vld [vmem:[%s5 + $0x28] sm:$0xff]
        %v569 = vld [vmem:[%s5 + $0x30] sm:$0xff]
        %v570 = vld [vmem:[%s5 + $0x38] sm:$0xff]
        %v571 = vld [vmem:[%s5 + $0x40] sm:$0xff]
        %v572 = vld [vmem:[%s5 + $0x48] sm:$0xff]
        %v573 = vld [vmem:[%s5 + $0x50] sm:$0xff]
        %v574 = vld [vmem:[%s5 + $0x58] sm:$0xff]
        %v575 = vld [vmem:[%s5 + $0x60] sm:$0xff]
        %v576 = vld [vmem:[%s5 + $0x68] sm:$0xff]
        %v577 = vld [vmem:[%s5 + $0x70] sm:$0xff]
        %v578 = vld [vmem:[%s5 + $0x78] sm:$0xff]
        %579 = vmatpush.msra.mxu0 %v578
        %580 = vmatpush.msra.mxu0 %v577
        %581 = vmatpush.msra.mxu0 %v576
        %582 = vmatpush.msra.mxu0 %v575
        %583 = vmatpush.msra.mxu0 %v574
        %584 = vmatpush.msra.mxu0 %v573
        %585 = vmatpush.msra.mxu0 %v572
        %586 = vmatpush.msra.mxu0 %v571
        %587 = vmatpush.msra.mxu0 %v570
        %588 = vmatpush.msra.mxu0 %v569
        %589 = vmatpush.msra.mxu0 %v568
        %590 = vmatpush.msra.mxu0 %v567
        %591 = vmatpush.msra.mxu0 %v566
        %592 = vmatpush.msra.mxu0 %v565
        %593 = vmatpush.msra.mxu0 %v564
        %594 = vmatpush.msra.mxu0 %v563
        %595 = vmatmul.f32.gmra.mxu0 %v562
        %v596 = vpop.f32.mrf.mxu0
        %v597 = vadd.f32 0.0, %v596
        %598 = vdwg.mxu0
        %599 = vst.msk [vmem:[%s276] sm:$0xff] %vm369, %v597
        %s600 = sand.u32 %s161, 1
        %s601 = scalar_lea.sflag [#allocation4], %s600
        %s602 = sand.u32 %s161, 1
        %s603 = smul.addr %s602, 8
        %s604 = scalar_lea.vmem [#allocation7], %s603
        // Predicated region
        $region53: #{tpu_custom_call.1} parent=43 // pred_check
          %p605 = pneg %p171
        $region54: #{tpu_custom_call.1} parent=43 // pred_check_branch
          %607 = sbr.rel (%p605) target = $region56
        $region55: #{tpu_custom_call.1} parent=43 // pred_region
          %609 = vsyncadd %s601, 0
          %s610 = smul.addr %s22, 8
          %s611 = scalar_lea.hbm %s6, %s610
          %s613 = sshll.u32 %s604, 4
          %s614 = int_to_ptr.vmem [resolvable:$true] %s613
          %s615 = sshll.u32 %s611, 4
          %s616 = int_to_ptr.hbm [resolvable:$true] %s615
          %618 = dma.vmem_to_hbm [thread:$0]  %s614, 128, %s616, %s601
        $region56: #{tpu_custom_call.1} parent=43 // pred_fallthru
          _
      $region44: #{tpu_custom_call.1} parent=5 // pred_fallthru
        _
      %p619 = scmp.le.s32.totalorder 2, %s17
      // Predicated region
      $region57: #{tpu_custom_call.1} parent=5 // pred_check
        %p620 = pneg %p619
      $region58: #{tpu_custom_call.1} parent=5 // pred_check_branch
        %622 = sbr.rel (%p620) target = $region60
      $region59: #{tpu_custom_call.1} parent=5 // pred_region
        %s623 = ssub.s32 %s17, 2
        // Predicated region
        $region61: #{tpu_custom_call.1} parent=59 // pred_check
          %p624 = pneg %p177
        $region62: #{tpu_custom_call.1} parent=59 // pred_check_branch
          %626 = sbr.rel (%p624) target = $region64
        $region63: #{tpu_custom_call.1} parent=59 // pred_region
          %s627 = sand.u32 %s162, 1
          %s628 = scalar_lea.sflag [#allocation4], %s627
          %s629 = sand.u32 %s162, 1
          %s630 = smul.addr %s629, 8
          %s631 = scalar_lea.vmem [#allocation7], %s630
          %633 = dma.done %s628, 128
        $region64: #{tpu_custom_call.1} parent=59 // pred_fallthru
          _
      $region60: #{tpu_custom_call.1} parent=5 // pred_fallthru
        _
    $region6: #{tpu_custom_call.1} parent=1 // loop_footer
      %s21 = sadd.s32 1, %s17
    $region7: #{tpu_custom_call.1} parent=1 // loop_footer_branch
      %16 = sbr.rel target = $region3
    $region8: #{tpu_custom_call.1} parent=1 // loop_exit
      _
    %634 = vsyncpa [#allocation3], 1
    %s635 = scalar_lea.sflag [#allocation3], 1
    %636 = vsyncpa %s635, 1
    %637 = vsyncpa [#allocation6], 1
    %638 = vsyncpa [#allocation4], 1
    %s639 = scalar_lea.sflag [#allocation4], 1
    %640 = vsyncpa %s639, 1

</llo_original>
